<compile_context>
chip_gen: v6e
topology: v6e:2x2x1
jax: 0.10.0
libtpu: 0.0.40
codegen_flags: <defaults>
</compile_context>

<pallas_src>
import functools
import itertools

import numpy as np
import jax
import jax.numpy as jnp
from jax.experimental import pallas as pl
from jax.experimental.pallas import tpu as pltpu


def _round_up(x, m):
    return (x + m - 1) // m * m


# ----------------------------------------------------------------------------
# Tiling / VMEM budget (works on v5e / v6e / v7x).
# ----------------------------------------------------------------------------
def _pick_tile(n, kc_pad, c_pad):
    # Large row tiles amortize per-grid-step overhead (mem-bound pipelines hit
    # ~85% of HBM roofline at >=512 on v6e); back off to respect a conservative
    # 24 MiB buffer budget so the same tiling fits v7x's 64 MiB physical VMEM.
    tn = 1024 if kc_pad <= 2048 else 512

    def vmem_bytes(t):
        return (2 * t * kc_pad * 2        # double-buffered gathered tile (bf16)
                + 2 * kc_pad * c_pad * 2  # double-buffered resident weight (bf16)
                + 2 * t * c_pad * 2       # double-buffered bf16 conv tile
                + 2 * 8 * c_pad * 4)      # double-buffered packed BN partials

    budget = 24 * 1024 * 1024
    while tn > 128 and vmem_bytes(tn) > budget:
        tn //= 2
    tn = min(tn, _round_up(max(n, 8), 8))
    # Explicit scoped-VMEM limit: raises v5e's 16 MiB default, stays under
    # v7x's 64 MiB physical.  (Very large Cin*Cout would additionally want the
    # contraction split into an 'arbitrary' reduction axis — not needed here.)
    vmem_limit = max(32 * 1024 * 1024, min(2 * vmem_bytes(tn), 48 * 1024 * 1024))
    return tn, vmem_limit


# ----------------------------------------------------------------------------
# Kernel 1: folded sparse deconv (single MXU dot per row tile) + fused
# per-tile BatchNorm partial statistics packed into one output block.
# ----------------------------------------------------------------------------
def _deconv_stats_kernel(g_ref, w_ref, o_ref, stats_ref):
    # g_ref: (tn, kc_pad) bf16 gathered+folded neighbor features
    # w_ref: (kc_pad, c_pad) bf16 folded weight (constant block index -> resident)
    y = jnp.dot(g_ref[...], w_ref[...], preferred_element_type=jnp.float32)
    # bf16 writeback halves conv-intermediate HBM traffic; BN statistics below
    # are taken from the f32 accumulator, so they are unaffected by the cast.
    o_ref[...] = y.astype(o_ref.dtype)

    # NOTE: rows beyond the N valid voxels are exact zeros (appended zero
    # feature row + zero jnp.pad), so they contribute nothing to the sums —
    # no per-row validity mask is needed.  Keep that invariant if the padding
    # scheme ever changes.
    c_pad = y.shape[1]
    s = jnp.sum(y, axis=0, keepdims=True)          # (1, c_pad)
    sq = jnp.sum(y * y, axis=0, keepdims=True)     # (1, c_pad)
    row = jax.lax.broadcasted_iota(jnp.int32, (8, c_pad), 0)
    sb = jnp.broadcast_to(s, (8, c_pad))
    sqb = jnp.broadcast_to(sq, (8, c_pad))
    stats = jnp.where(row == 0, sb, jnp.where(row == 1, sqb, 0.0))
    stats_ref[...] = stats[None]                   # sublane 0 = sum, 1 = sumsq


def _deconv_with_stats(gathered, w_folded, *, tn, vmem_limit):
    n_pad, kc_pad = gathered.shape
    c_pad = w_folded.shape[1]
    num_tiles = n_pad // tn
    return pl.pallas_call(
        _deconv_stats_kernel,
        out_shape=(
            jax.ShapeDtypeStruct((n_pad, c_pad), jnp.bfloat16),
            jax.ShapeDtypeStruct((num_tiles, 8, c_pad), jnp.float32),
        ),
        grid_spec=pltpu.PrefetchScalarGridSpec(
            num_scalar_prefetch=0,
            grid=(num_tiles,),
            in_specs=[
                pl.BlockSpec((tn, kc_pad), lambda i: (i, 0)),
                # Whole folded weight; constant block index -> loaded once and
                # kept resident.  (A further v7x-only refinement would be
                # pipeline_mode=pl.Buffered(1) to drop its second buffer.)
                pl.BlockSpec((kc_pad, c_pad), lambda i: (0, 0)),
            ],
            out_specs=[
                pl.BlockSpec((tn, c_pad), lambda i: (i, 0)),
                pl.BlockSpec((1, 8, c_pad), lambda i: (i, 0, 0)),
            ],
        ),
        compiler_params=pltpu.CompilerParams(
            dimension_semantics=("parallel",),
            vmem_limit_bytes=vmem_limit),
    )(gathered, w_folded)


# ----------------------------------------------------------------------------
# Kernel 2: row-tiled fused scale/bias (BN folded into one affine) + ReLU,
# written in-place (bf16) over the dead conv intermediate.
# ----------------------------------------------------------------------------
def _scale_bias_relu_kernel(x_ref, s_ref, b_ref, o_ref):
    y = x_ref[...].astype(jnp.float32) * s_ref[...] + b_ref[...]
    o_ref[...] = jnp.maximum(y, 0.0).astype(o_ref.dtype)


def _scale_bias_relu(x, scale, bias, *, tn, vmem_limit):
    n_pad, c_pad = x.shape
    num_tiles = n_pad // tn
    return pl.pallas_call(
        _scale_bias_relu_kernel,
        out_shape=jax.ShapeDtypeStruct((n_pad, c_pad), x.dtype),
        grid_spec=pltpu.PrefetchScalarGridSpec(
            num_scalar_prefetch=0,
            grid=(num_tiles,),
            in_specs=[
                pl.BlockSpec((tn, c_pad), lambda i: (i, 0)),
                pl.BlockSpec((1, c_pad), lambda i: (0, 0)),
                pl.BlockSpec((1, c_pad), lambda i: (0, 0)),
            ],
            out_specs=pl.BlockSpec((tn, c_pad), lambda i: (i, 0)),
        ),
        input_output_aliases={0: 0},   # overwrite the conv buffer in place
        compiler_params=pltpu.CompilerParams(
            dimension_semantics=("parallel",),
            vmem_limit_bytes=vmem_limit),
    )(x, scale, bias)


# ----------------------------------------------------------------------------
# Host-side glue: vectorized kernel map (neighbor indices).
# ----------------------------------------------------------------------------
def build_kernel_map(coords_np, ks=3):
    """coords_np: [N, 4] int (batch, x, y, z).
    Returns idx [K3, N] int32; missing neighbors map to N (zero-feature row)."""
    coords = np.asarray(coords_np, dtype=np.int64)
    n = coords.shape[0]
    half = ks // 2
    offs = np.array(list(itertools.product(range(-half, half + 1), repeat=3)),
                    dtype=np.int64)                                   # [K3, 3]
    k3 = offs.shape[0]
    b = coords[:, 0]
    xyz = coords[:, 1:]
    lo = xyz.min(axis=0) - half
    span = xyz.max(axis=0) + half - lo + 1

    def encode(bb, pp):
        s = pp - lo
        return ((bb * span[0] + s[:, 0]) * span[1] + s[:, 1]) * span[2] + s[:, 2]

    keys = encode(b, xyz)
    order = np.argsort(keys, kind="stable")
    skeys = keys[order]

    q_xyz = (xyz[None, :, :] + offs[:, None, :]).reshape(-1, 3)       # [K3*N, 3]
    q_b = np.broadcast_to(b[None, :], (k3, n)).reshape(-1)
    qkeys = encode(q_b, q_xyz)
    pos = np.minimum(np.searchsorted(skeys, qkeys), n - 1)
    found = skeys[pos] == qkeys
    idx = np.where(found, order[pos], n).astype(np.int32)
    return idx.reshape(k3, n)


# ----------------------------------------------------------------------------
# Device-side forward (jitted): deconv + BN + ReLU given precomputed idx.
# ----------------------------------------------------------------------------
@functools.partial(jax.jit, static_argnames=("ks", "eps"))
def _deconv_bn_relu(feats, idx, weight, gamma, beta, *, ks, eps):
    n, cin = feats.shape
    k3, _, cout = weight.shape

    # Append a zero row so missing neighbors read zeros; together with the zero
    # jnp.pad below this keeps padded rows exactly zero (lets the kernel drop
    # the per-row validity mask for the BN statistics).
    feats_z = jnp.concatenate(
        [feats.astype(jnp.bfloat16), jnp.zeros((1, cin), jnp.bfloat16)], axis=0)

    # Fold the K^3 offset axis into the contraction dim: [N, K3*Cin] (bf16).
    # (See module-level TODO(synk) about moving this gather in-kernel.)
    gathered = feats_z[idx.T].reshape(n, k3 * cin)
    w_folded = weight.astype(jnp.bfloat16).reshape(k3 * cin, cout)

    kc = k3 * cin
    kc_pad = _round_up(kc, 128)
    c_pad = _round_up(cout, 128)
    tn, vmem_limit = _pick_tile(n, kc_pad, c_pad)
    n_pad = _round_up(n, tn)

    gathered = jnp.pad(gathered, ((0, n_pad - n), (0, kc_pad - kc)))
    w_folded = jnp.pad(w_folded, ((0, kc_pad - kc), (0, c_pad - cout)))
    gamma_p = jnp.pad(gamma.astype(jnp.float32), (0, c_pad - cout),
                      constant_values=1.0)
    beta_p = jnp.pad(beta.astype(jnp.float32), (0, c_pad - cout))

    conv, stats = _deconv_with_stats(gathered, w_folded, tn=tn,
                                     vmem_limit=vmem_limit)

    # Tiny per-channel finalize: BN (training-mode batch stats, biased var)
    # folded into one scale/bias.  NOTE: E[x^2]-E[x]^2 in f32 can cancel when
    # |mean| >> std; clamped at 0 (a shifted/Welford form would be more robust).
    total = jnp.sum(stats[:, 0, :], axis=0)
    total2 = jnp.sum(stats[:, 1, :], axis=0)
    mean = total / n
    var = jnp.maximum(total2 / n - mean * mean, 0.0)
    scale = gamma_p * jax.lax.rsqrt(var + eps)
    bias = beta_p - mean * scale

    out = _scale_bias_relu(conv, scale.reshape(1, c_pad), bias.reshape(1, c_pad),
                           tn=tn, vmem_limit=vmem_limit)
    # Cast the (small, unpadded) slice back to f32 for parity with the PyTorch
    # module's output dtype; bf16 consumers can take out[:n, :cout] directly.
    return out[:n, :cout].astype(jnp.float32)


# ----------------------------------------------------------------------------
# Full block: transposed sparse conv (stride=1) + BatchNorm1d + ReLU.
# ----------------------------------------------------------------------------
def basic_deconvolution_block(feats, coords_np, weight, gamma, beta,
                              ks=3, stride=1, eps=1e-5):
    """feats: [N, Cin] f32, coords_np: [N, 4] int, weight: [K^3, Cin, Cout]."""
    assert stride == 1, "stride-1 transposed conv: output coords == input coords"
    n, cin = feats.shape
    k3, cin_w, cout = weight.shape
    assert cin_w == cin and k3 == ks ** 3

    idx = build_kernel_map(coords_np, ks=ks)              # [K3, N], missing -> N
    return _deconv_bn_relu(feats, jnp.asarray(idx), weight, gamma, beta,
                           ks=ks, eps=eps)


# ----------------------------------------------------------------------------
# Example / correctness check.
# ----------------------------------------------------------------------------
if __name__ == "__main__":
    INC, OUTC, KS = 4, 8, 3
    K3 = KS ** 3
    N_PER_BATCH, BATCH = 32, 2
    N = N_PER_BATCH * BATCH

    key = jax.random.PRNGKey(0)
    kf, kw, kc = jax.random.split(key, 3)

    # deterministic sparse coordinates: 32 unique voxels per batch in a 4^3 cube
    grid_pts = np.array(
        [(x, y, z) for x in range(4) for y in range(4) for z in range(4)],
        dtype=np.int32)
    perm = np.asarray(jax.random.permutation(kc, grid_pts.shape[0]))
    coords = []
    for b in range(BATCH):
        sel = grid_pts[perm[:N_PER_BATCH]]
        coords.append(
            np.concatenate([np.full((N_PER_BATCH, 1), b, np.int32), sel], axis=1))
    coords_np = np.concatenate(coords, axis=0)  # [N, 4]

    feats = jax.random.normal(kf, (N, INC), dtype=jnp.float32)
    weight = jax.random.normal(kw, (K3, INC, OUTC), dtype=jnp.float32) * 0.1
    gamma = jnp.ones((OUTC,), dtype=jnp.float32)   # PyTorch BN default init
    beta = jnp.zeros((OUTC,), dtype=jnp.float32)

    out = basic_deconvolution_block(feats, coords_np, weight, gamma, beta, ks=KS)
    out = jax.block_until_ready(out)

    # pure-JAX reference mirroring the kernel's bf16 rounding points
    idx = build_kernel_map(coords_np, ks=KS)                     # [K3, N]
    feats_bf = feats.astype(jnp.bfloat16).astype(jnp.float32)
    w_bf = weight.astype(jnp.bfloat16).astype(jnp.float32)
    feats_zr = jnp.concatenate([feats_bf, jnp.zeros((1, INC), jnp.float32)], 0)
    gathered_ref = feats_zr[jnp.asarray(idx)]                    # [K3, N, Cin]
    conv_ref = jnp.einsum("knc,kcd->nd", gathered_ref, w_bf)
    mean = conv_ref.mean(axis=0, keepdims=True)
    var = ((conv_ref - mean) ** 2).mean(axis=0, keepdims=True)   # biased (BN)
    scale = jax.lax.rsqrt(var + 1e-5) * gamma
    bias = beta - mean * scale
    x_bf = conv_ref.astype(jnp.bfloat16).astype(jnp.float32)     # bf16 conv buf
    ref = jnp.maximum(x_bf * scale + bias, 0.0)
    ref = ref.astype(jnp.bfloat16).astype(jnp.float32)           # bf16 output

    # bf16 intermediate/output path => tolerance sized for a couple of bf16 ulps
    np.testing.assert_allclose(np.asarray(out), np.asarray(ref),
                               rtol=1e-2, atol=1e-2)
    print("KERNEL_OK")
</pallas_src>

<mosaic_0001>
module attributes {stable_mosaic.version = 11 : i64} {
  func.func @_deconv_stats_kernel(%arg0: i32, %arg1: memref<64x128xbf16, #tpu.memory_space<vmem>>, %arg2: memref<128x128xbf16, #tpu.memory_space<vmem>>, %arg3: memref<64x128xbf16, #tpu.memory_space<vmem>>, %arg4: memref<1x8x128xf32, #tpu.memory_space<vmem>>) attributes {dimension_semantics = [#tpu.dimension_semantics<parallel>], iteration_bounds = array<i64: 1>, scalar_prefetch = 0 : i64, scratch_operands = 0 : i64, tpu.core_type = #tpu.core_type<tc>, window_params = [{transform_indices = @transform_0, window_bounds = array<i64: 64, 128>}, {pipeline_mode = #tpu.pipeline_mode<synchronous>, transform_indices = @transform_1, window_bounds = array<i64: 128, 128>}, {transform_indices = @transform_2, window_bounds = array<i64: 64, 128>}, {transform_indices = @transform_3, window_bounds = array<i64: 1, 8, 128>}]} {
    %c0 = arith.constant 0 : index
    %c0_0 = arith.constant 0 : index
    %0 = vector.load %arg1[%c0, %c0_0] : memref<64x128xbf16, #tpu.memory_space<vmem>>, vector<64x128xbf16>
    %c0_1 = arith.constant 0 : index
    %c0_2 = arith.constant 0 : index
    %1 = vector.load %arg2[%c0_1, %c0_2] : memref<128x128xbf16, #tpu.memory_space<vmem>>, vector<128x128xbf16>
    %cst = arith.constant dense<0.000000e+00> : vector<64x128xf32>
    %2 = tpu.matmul %0, %1, %cst {dimension_numbers = #tpu.dot_dimension_numbers<[1], [0], [0], [1], [0, 0, 1, 1], [], []>} : vector<64x128xbf16>, vector<128x128xbf16>, vector<64x128xf32> -> vector<64x128xf32>
    %3 = arith.truncf %2 : vector<64x128xf32> to vector<64x128xbf16>
    %c0_3 = arith.constant 0 : index
    %c0_4 = arith.constant 0 : index
    %4 = vector.load %arg3[%c0_3, %c0_4] : memref<64x128xbf16, #tpu.memory_space<vmem>>, vector<64x128xbf16>
    tpu.vector_store %arg3[%c0_3, %c0_4], %3 {strides = array<i32>} : memref<64x128xbf16, #tpu.memory_space<vmem>>, vector<64x128xbf16>,
    %cst_5 = arith.constant dense<0.000000e+00> : vector<128xf32>
    %5 = vector.multi_reduction <add>, %2, %cst_5 [0] : vector<64x128xf32> to vector<128xf32>
    %6 = vector.shape_cast %5 : vector<128xf32> to vector<1x128xf32>
    %7 = arith.mulf %2, %2 : vector<64x128xf32>
    %cst_6 = arith.constant dense<0.000000e+00> : vector<128xf32>
    %8 = vector.multi_reduction <add>, %7, %cst_6 [0] : vector<64x128xf32> to vector<128xf32>
    %9 = vector.shape_cast %8 : vector<128xf32> to vector<1x128xf32>
    %10 = tpu.iota {dimensions = array<i32: 0>} : vector<8x128xi32>
    %11 = vector.shape_cast %6 : vector<1x128xf32> to vector<1x128xf32>
    %12 = vector.broadcast %11 : vector<1x128xf32> to vector<8x128xf32>
    %13 = vector.shape_cast %9 : vector<1x128xf32> to vector<1x128xf32>
    %14 = vector.broadcast %13 : vector<1x128xf32> to vector<8x128xf32>
    %c0_i32 = arith.constant 0 : i32
    %15 = vector.broadcast %c0_i32 : i32 to vector<8x128xi32>
    %16 = arith.cmpi eq, %10, %15 : vector<8x128xi32>
    %c1_i32 = arith.constant 1 : i32
    %17 = vector.broadcast %c1_i32 : i32 to vector<8x128xi32>
    %18 = arith.cmpi eq, %10, %17 : vector<8x128xi32>
    %cst_7 = arith.constant 0.000000e+00 : f32
    %19 = vector.broadcast %cst_7 : f32 to vector<8x128xf32>
    %20 = arith.select %18, %14, %19 : vector<8x128xi1>, vector<8x128xf32>
    %21 = arith.select %16, %12, %20 : vector<8x128xi1>, vector<8x128xf32>
    %22 = vector.shape_cast %21 : vector<8x128xf32> to vector<1x8x128xf32>
    %c0_8 = arith.constant 0 : index
    %c0_9 = arith.constant 0 : index
    %c0_10 = arith.constant 0 : index
    %23 = vector.load %arg4[%c0_8, %c0_9, %c0_10] : memref<1x8x128xf32, #tpu.memory_space<vmem>>, vector<1x8x128xf32>
    tpu.vector_store %arg4[%c0_8, %c0_9, %c0_10], %22 {strides = array<i32>} : memref<1x8x128xf32, #tpu.memory_space<vmem>>, vector<1x8x128xf32>,
    return
  }
  func.func @transform_0(%arg0: i32) -> (i32, i32) {
    %c0_i32 = arith.constant 0 : i32
    %c0_i32_0 = arith.constant 0 : i32
    return %arg0, %c0_i32 : i32, i32
  }
  func.func @transform_1(%arg0: i32) -> (i32, i32) {
    %c0_i32 = arith.constant 0 : i32
    %c0_i32_0 = arith.constant 0 : i32
    %c0_i32_1 = arith.constant 0 : i32
    return %c0_i32, %c0_i32_0 : i32, i32
  }
  func.func @transform_2(%arg0: i32) -> (i32, i32) {
    %c0_i32 = arith.constant 0 : i32
    %c0_i32_0 = arith.constant 0 : i32
    return %arg0, %c0_i32 : i32, i32
  }
  func.func @transform_3(%arg0: i32) -> (i32, i32, i32) {
    %c0_i32 = arith.constant 0 : i32
    %c0_i32_0 = arith.constant 0 : i32
    %c0_i32_1 = arith.constant 0 : i32
    return %arg0, %c0_i32, %c0_i32_0 : i32, i32, i32
  }
}

module attributes {stable_mosaic.version = 11 : i64} {
  func.func @_scale_bias_relu_kernel(%arg0: i32, %arg1: memref<64x128xbf16, #tpu.memory_space<vmem>>, %arg2: memref<1x128xf32, #tpu.memory_space<vmem>>, %arg3: memref<1x128xf32, #tpu.memory_space<vmem>>, %arg4: memref<64x128xbf16, #tpu.memory_space<vmem>>) attributes {dimension_semantics = [#tpu.dimension_semantics<parallel>], iteration_bounds = array<i64: 1>, scalar_prefetch = 0 : i64, scratch_operands = 0 : i64, tpu.core_type = #tpu.core_type<tc>, window_params = [{transform_indices = @transform_0, window_bounds = array<i64: 64, 128>}, {pipeline_mode = #tpu.pipeline_mode<synchronous>, transform_indices = @transform_1, window_bounds = array<i64: 1, 128>}, {pipeline_mode = #tpu.pipeline_mode<synchronous>, transform_indices = @transform_2, window_bounds = array<i64: 1, 128>}, {transform_indices = @transform_3, window_bounds = array<i64: 64, 128>}]} {
    %c0 = arith.constant 0 : index
    %c0_0 = arith.constant 0 : index
    %0 = vector.load %arg1[%c0, %c0_0] : memref<64x128xbf16, #tpu.memory_space<vmem>>, vector<64x128xbf16>
    %1 = arith.extf %0 : vector<64x128xbf16> to vector<64x128xf32>
    %c0_1 = arith.constant 0 : index
    %c0_2 = arith.constant 0 : index
    %2 = vector.load %arg2[%c0_1, %c0_2] : memref<1x128xf32, #tpu.memory_space<vmem>>, vector<1x128xf32>
    %3 = vector.broadcast %2 : vector<1x128xf32> to vector<64x128xf32>
    %4 = arith.mulf %1, %3 : vector<64x128xf32>
    %c0_3 = arith.constant 0 : index
    %c0_4 = arith.constant 0 : index
    %5 = vector.load %arg3[%c0_3, %c0_4] : memref<1x128xf32, #tpu.memory_space<vmem>>, vector<1x128xf32>
    %6 = vector.broadcast %5 : vector<1x128xf32> to vector<64x128xf32>
    %7 = arith.addf %4, %6 : vector<64x128xf32>
    %cst = arith.constant 0.000000e+00 : f32
    %8 = vector.broadcast %cst : f32 to vector<64x128xf32>
    %9 = arith.maximumf %7, %8 : vector<64x128xf32>
    %10 = arith.truncf %9 : vector<64x128xf32> to vector<64x128xbf16>
    %c0_5 = arith.constant 0 : index
    %c0_6 = arith.constant 0 : index
    %11 = vector.load %arg4[%c0_5, %c0_6] : memref<64x128xbf16, #tpu.memory_space<vmem>>, vector<64x128xbf16>
    tpu.vector_store %arg4[%c0_5, %c0_6], %10 {strides = array<i32>} : memref<64x128xbf16, #tpu.memory_space<vmem>>, vector<64x128xbf16>,
    return
  }
  func.func @transform_0(%arg0: i32) -> (i32, i32) {
    %c0_i32 = arith.constant 0 : i32
    %c0_i32_0 = arith.constant 0 : i32
    return %arg0, %c0_i32 : i32, i32
  }
  func.func @transform_1(%arg0: i32) -> (i32, i32) {
    %c0_i32 = arith.constant 0 : i32
    %c0_i32_0 = arith.constant 0 : i32
    %c0_i32_1 = arith.constant 0 : i32
    return %c0_i32, %c0_i32_0 : i32, i32
  }
  func.func @transform_2(%arg0: i32) -> (i32, i32) {
    %c0_i32 = arith.constant 0 : i32
    %c0_i32_0 = arith.constant 0 : i32
    %c0_i32_1 = arith.constant 0 : i32
    return %c0_i32, %c0_i32_0 : i32, i32
  }
  func.func @transform_3(%arg0: i32) -> (i32, i32) {
    %c0_i32 = arith.constant 0 : i32
    %c0_i32_0 = arith.constant 0 : i32
    return %arg0, %c0_i32 : i32, i32
  }
}

</mosaic_0001>

<llo_original>
// kernel: _deconv_bn_relu.3
$region0: #{_deconv_bn_relu.3}
  #allocation0 [shape = 'u32[]', space=smem, size = 0x4, offset = 0x4, fixed_abs, tag = 'smem constant byte address 0x4 - core index']
  #allocation1 [shape = 'u32[144,128]{1,0:T(1,128)}', space=vmem, size = 0x12000, scoped, tag = 'internal scratch']
  %s0 = inlined_call_operand.vmem [shape: bf16[64,128], index: 0, kind: input, shape index: {}, may-alias: {0,3}]
  %s1 = inlined_call_operand.vmem [shape: f32[1,128], index: 1, kind: input, shape index: {}]
  %s2 = inlined_call_operand.vmem [shape: f32[1,128], index: 2, kind: input, shape index: {}]
  %s3 = inlined_call_operand.vmem [shape: bf16[64,128], index: 3, kind: output, shape index: {}, may-alias: {0,3}]
  %s4 = sld [smem:[#allocation0]]
  $region22: #{_deconv_bn_relu.3} parent=0
    _
  %s6 = ssub.s32 1, %s4
  %s7 = scalar_select 0, %s6, %s4
  // Predicated region
  $region2: #{_deconv_bn_relu.3} parent=0 // pred_check
    _
  $region3: #{_deconv_bn_relu.3} parent=0 // pred_check_branch
    %9 = sbr.rel (0) target = $region5
  $region4: #{_deconv_bn_relu.3} parent=0 // pred_region
    _
  $region5: #{_deconv_bn_relu.3} parent=0 // pred_fallthru
    _
  // Predicated region
  $region6: #{_deconv_bn_relu.3} parent=0 // pred_check
    _
  $region7: #{_deconv_bn_relu.3} parent=0 // pred_check_branch
    %11 = sbr.rel (0) target = $region9
  $region8: #{_deconv_bn_relu.3} parent=0 // pred_region
    _
  $region9: #{_deconv_bn_relu.3} parent=0 // pred_fallthru
    _
  // Predicated region
  $region10: #{_deconv_bn_relu.3} parent=0 // pred_check
    _
  $region11: #{_deconv_bn_relu.3} parent=0 // pred_check_branch
    %13 = sbr.rel (0) target = $region13
  $region12: #{_deconv_bn_relu.3} parent=0 // pred_region
    _
  $region13: #{_deconv_bn_relu.3} parent=0 // pred_fallthru
    _
  %v14 = vld [vmem:[%s0] sm:$0xf]
  %v15 = vld [vmem:[%s0 + $0x4] sm:$0xf]
  %v16 = vld [vmem:[%s0 + $0x8] sm:$0xf]
  %v17 = vld [vmem:[%s0 + $0xc] sm:$0xf]
  %v18 = vld [vmem:[%s0 + $0x10] sm:$0xf]
  %v19 = vld [vmem:[%s0 + $0x14] sm:$0xf]
  %v20 = vld [vmem:[%s0 + $0x18] sm:$0xf]
  %v21 = vld [vmem:[%s0 + $0x1c] sm:$0xf]
  %v22 = vunpack.c.l.bf16 %v14
  %v23 = vunpack.c.l.bf16 %v15
  %v24 = vunpack.c.l.bf16 %v16
  %v25 = vunpack.c.l.bf16 %v17
  %v26 = vunpack.c.l.bf16 %v18
  %v27 = vunpack.c.l.bf16 %v19
  %v28 = vunpack.c.l.bf16 %v20
  %v29 = vunpack.c.l.bf16 %v21
  %v30 = vld [vmem:[%s1] sm:$0x1]
  %v32 = vlaneseq
  %v33 = vshrl.u32 %v32, 7
  %v34 = vsub.s32 0, %v33
  %v35 = vrot.slane %v30, %v34
  %v37 = vmul.f32 %v22, %v35
  %v38 = vmul.f32 %v23, %v35
  %v39 = vmul.f32 %v24, %v35
  %v40 = vmul.f32 %v25, %v35
  %v41 = vmul.f32 %v26, %v35
  %v42 = vmul.f32 %v27, %v35
  %v43 = vmul.f32 %v28, %v35
  %v44 = vmul.f32 %v29, %v35
  %v45 = vld [vmem:[%s2] sm:$0x1]
  %v47 = vlaneseq
  %v48 = vshrl.u32 %v47, 7
  %v49 = vsub.s32 0, %v48
  %v50 = vrot.slane %v45, %v49
  %v52 = vadd.f32 %v37, %v50
  %v53 = vadd.f32 %v38, %v50
  %v54 = vadd.f32 %v39, %v50
  %v55 = vadd.f32 %v40, %v50
  %v56 = vadd.f32 %v41, %v50
  %v57 = vadd.f32 %v42, %v50
  %v58 = vadd.f32 %v43, %v50
  %v59 = vadd.f32 %v44, %v50
  %v60 = vmax.f32 %v52, 0.0
  %v61 = vmax.f32 %v53, 0.0
  %v62 = vmax.f32 %v54, 0.0
  %v63 = vmax.f32 %v55, 0.0
  %v64 = vmax.f32 %v56, 0.0
  %v65 = vmax.f32 %v57, 0.0
  %v66 = vmax.f32 %v58, 0.0
  %v67 = vmax.f32 %v59, 0.0
  %v68 = vpack.c.bf16 %v61, %v60
  %v69 = vpack.c.bf16 %v63, %v62
  %v70 = vpack.c.bf16 %v65, %v64
  %v71 = vpack.c.bf16 %v67, %v66
  %v76 = vunpack.c.l.b16 %v68
  %v77 = vunpack.c.h.b16 %v68
  %v78 = vunpack.c.l.b16 %v69
  %v79 = vunpack.c.h.b16 %v69
  %v80 = vunpack.c.l.b16 %v70
  %v81 = vunpack.c.h.b16 %v70
  %v82 = vunpack.c.l.b16 %v71
  %v83 = vunpack.c.h.b16 %v71
  %v84 = vpack.c.b16 %v76, %v76
  %v85 = vpack.c.b16 %v77, %v77
  %v86 = vpack.c.b16 %v78, %v78
  %v87 = vpack.c.b16 %v79, %v79
  %v88 = vpack.c.b16 %v80, %v80
  %v89 = vpack.c.b16 %v81, %v81
  %v90 = vpack.c.b16 %v82, %v82
  %v91 = vpack.c.b16 %v83, %v83
  %100 = vst [vmem:[%s3] sm:$0xf] %v84
  %101 = vst [vmem:[%s3 + $0x4] sm:$0xf] %v85
  %102 = vst [vmem:[%s3 + $0x8] sm:$0xf] %v86
  %103 = vst [vmem:[%s3 + $0xc] sm:$0xf] %v87
  %104 = vst [vmem:[%s3 + $0x10] sm:$0xf] %v88
  %105 = vst [vmem:[%s3 + $0x14] sm:$0xf] %v89
  %106 = vst [vmem:[%s3 + $0x18] sm:$0xf] %v90
  %107 = vst [vmem:[%s3 + $0x1c] sm:$0xf] %v91
  // Predicated region
  $region14: #{_deconv_bn_relu.3} parent=0 // pred_check
    _
  $region15: #{_deconv_bn_relu.3} parent=0 // pred_check_branch
    %109 = sbr.rel (0) target = $region17
  $region16: #{_deconv_bn_relu.3} parent=0 // pred_region
    _
  $region17: #{_deconv_bn_relu.3} parent=0 // pred_fallthru
    _
  // Predicated region
  $region18: #{_deconv_bn_relu.3} parent=0 // pred_check
    _
  $region19: #{_deconv_bn_relu.3} parent=0 // pred_check_branch
    %111 = sbr.rel (0) target = $region21
  $region20: #{_deconv_bn_relu.3} parent=0 // pred_region
    _
  $region21: #{_deconv_bn_relu.3} parent=0 // pred_fallthru
    _

// kernel: _deconv_bn_relu.2
$region0: #{_deconv_bn_relu.2}
  #allocation0 [shape = 'u32[]', space=smem, size = 0x4, offset = 0x4, fixed_abs, tag = 'smem constant byte address 0x4 - core index']
  #allocation1 [shape = 'u32[144,128]{1,0:T(1,128)}', space=vmem, size = 0x12000, scoped, tag = 'internal scratch']
  %s0 = inlined_call_operand.vmem [shape: bf16[64,128], index: 0, kind: input, shape index: {}]
  %s1 = inlined_call_operand.vmem [shape: bf16[128,128], index: 1, kind: input, shape index: {}]
  %s2 = inlined_call_operand.vmem [shape: bf16[64,128], index: 2, kind: output, shape index: {0}]
  %s3 = inlined_call_operand.vmem [shape: f32[1,8,128], index: 3, kind: output, shape index: {1}]
  %4 = xla_tuple %s2, %s3
  %s5 = sld [smem:[#allocation0]]
  $region26: #{_deconv_bn_relu.2} parent=0
    _
  %s7 = ssub.s32 1, %s5
  %s8 = scalar_select 0, %s7, %s5
  // Predicated region
  $region2: #{_deconv_bn_relu.2} parent=0 // pred_check
    _
  $region3: #{_deconv_bn_relu.2} parent=0 // pred_check_branch
    %10 = sbr.rel (0) target = $region5
  $region4: #{_deconv_bn_relu.2} parent=0 // pred_region
    _
  $region5: #{_deconv_bn_relu.2} parent=0 // pred_fallthru
    _
  // Predicated region
  $region6: #{_deconv_bn_relu.2} parent=0 // pred_check
    _
  $region7: #{_deconv_bn_relu.2} parent=0 // pred_check_branch
    %12 = sbr.rel (0) target = $region9
  $region8: #{_deconv_bn_relu.2} parent=0 // pred_region
    _
  $region9: #{_deconv_bn_relu.2} parent=0 // pred_fallthru
    _
  %v14 = vld [vmem:[%s0] sm:$0xf]
  %v15 = vld [vmem:[%s0 + $0x4] sm:$0xf]
  %v16 = vld [vmem:[%s0 + $0x8] sm:$0xf]
  %v17 = vld [vmem:[%s0 + $0xc] sm:$0xf]
  %v18 = vld [vmem:[%s0 + $0x10] sm:$0xf]
  %v19 = vld [vmem:[%s0 + $0x14] sm:$0xf]
  %v20 = vld [vmem:[%s0 + $0x18] sm:$0xf]
  %v21 = vld [vmem:[%s0 + $0x1c] sm:$0xf]
  %v22 = vld [vmem:[%s1] sm:$0xf]
  %v23 = vld [vmem:[%s1 + $0x4] sm:$0xf]
  %v24 = vld [vmem:[%s1 + $0x8] sm:$0xf]
  %v25 = vld [vmem:[%s1 + $0xc] sm:$0xf]
  %v26 = vld [vmem:[%s1 + $0x10] sm:$0xf]
  %v27 = vld [vmem:[%s1 + $0x14] sm:$0xf]
  %v28 = vld [vmem:[%s1 + $0x18] sm:$0xf]
  %v29 = vld [vmem:[%s1 + $0x1c] sm:$0xf]
  %v30 = vld [vmem:[%s1 + $0x20] sm:$0xf]
  %v31 = vld [vmem:[%s1 + $0x24] sm:$0xf]
  %v32 = vld [vmem:[%s1 + $0x28] sm:$0xf]
  %v33 = vld [vmem:[%s1 + $0x2c] sm:$0xf]
  %v34 = vld [vmem:[%s1 + $0x30] sm:$0xf]
  %v35 = vld [vmem:[%s1 + $0x34] sm:$0xf]
  %v36 = vld [vmem:[%s1 + $0x38] sm:$0xf]
  %v37 = vld [vmem:[%s1 + $0x3c] sm:$0xf]
  %v46 = vunpack.c.l.b16 %v14
  %v47 = vunpack.c.l.b16 %v15
  %v48 = vunpack.c.l.b16 %v16
  %v49 = vunpack.c.l.b16 %v17
  %v50 = vunpack.c.l.b16 %v18
  %v51 = vunpack.c.l.b16 %v19
  %v52 = vunpack.c.l.b16 %v20
  %v53 = vunpack.c.l.b16 %v21
  %v54 = vpack.c.b16 %v47, %v46
  %v55 = vpack.c.b16 %v49, %v48
  %v56 = vpack.c.b16 %v51, %v50
  %v57 = vpack.c.b16 %v53, %v52
  %v78 = vunpack.c.l.b16 %v22
  %v79 = vunpack.c.l.b16 %v23
  %v80 = vunpack.c.l.b16 %v24
  %v81 = vunpack.c.l.b16 %v25
  %v82 = vunpack.c.l.b16 %v26
  %v83 = vunpack.c.l.b16 %v27
  %v84 = vunpack.c.l.b16 %v28
  %v85 = vunpack.c.l.b16 %v29
  %v86 = vunpack.c.l.b16 %v30
  %v87 = vunpack.c.l.b16 %v31
  %v88 = vunpack.c.l.b16 %v32
  %v89 = vunpack.c.l.b16 %v33
  %v90 = vunpack.c.l.b16 %v34
  %v91 = vunpack.c.l.b16 %v35
  %v92 = vunpack.c.l.b16 %v36
  %v93 = vunpack.c.l.b16 %v37
  %v94 = vpack.c.b16 %v79, %v78
  %v95 = vpack.c.b16 %v81, %v80
  %v96 = vpack.c.b16 %v83, %v82
  %v97 = vpack.c.b16 %v85, %v84
  %v98 = vpack.c.b16 %v87, %v86
  %v99 = vpack.c.b16 %v89, %v88
  %v100 = vpack.c.b16 %v91, %v90
  %v101 = vpack.c.b16 %v93, %v92
  %110 = vmatprep.subr.bf16.mxu0 0
  %111 = vmatpush1.bf16.msra.mxu0 %v101
  %112 = vmatprep.subr.bf16.mxu0 0
  %113 = vmatpush1.bf16.msra.mxu0 %v100
  %114 = vmatprep.subr.bf16.mxu0 0
  %115 = vmatpush1.bf16.msra.mxu0 %v99
  %116 = vmatprep.subr.bf16.mxu0 0
  %117 = vmatpush1.bf16.msra.mxu0 %v98
  %118 = vmatprep.subr.bf16.mxu0 0
  %119 = vmatpush1.bf16.msra.mxu0 %v97
  %120 = vmatprep.subr.bf16.mxu0 0
  %121 = vmatpush1.bf16.msra.mxu0 %v96
  %122 = vmatprep.subr.bf16.mxu0 0
  %123 = vmatpush1.bf16.msra.mxu0 %v95
  %124 = vmatprep.subr.bf16.mxu0 0
  %125 = vmatpush1.bf16.msra.mxu0 %v94
  %126 = vmatprep.subr.bf16.mxu0 0
  %127 = vmatpush2.bf16.msra.mxu0 0
  %128 = vmatprep.subr.bf16.mxu0 0
  %129 = vmatpush2.bf16.msra.mxu0 0
  %130 = vmatprep.subr.bf16.mxu0 0
  %131 = vmatpush2.bf16.msra.mxu0 0
  %132 = vmatprep.subr.bf16.mxu0 0
  %133 = vmatpush2.bf16.msra.mxu0 0
  %134 = vmatprep.subr.bf16.mxu0 0
  %135 = vmatpush2.bf16.msra.mxu0 0
  %136 = vmatprep.subr.bf16.mxu0 0
  %137 = vmatpush2.bf16.msra.mxu0 0
  %138 = vmatprep.subr.bf16.mxu0 0
  %139 = vmatpush2.bf16.msra.mxu0 0
  %140 = vmatprep.subr.bf16.mxu0 0
  %141 = vmatpush2.bf16.msra.mxu0 0
  %142 = vmatprep.mubr.bf16.mxu0 0
  %143 = vmatmul.mubr.bf16.gmra.mxu0 %v54
  %v144 = vpop.f32.mrf.mxu0
  %v145 = vadd.f32 0.0, %v144
  %v146 = vpop.f32.mrf.mxu0
  %v147 = vpop.f32.mrf.mxu0
  %v148 = vadd.f32 0.0, %v147
  %v149 = vpop.f32.mrf.mxu0
  %150 = vmatprep.mubr.bf16.mxu0 0
  %151 = vmatmul.mubr.bf16.gmra.mxu0 %v55
  %v152 = vpop.f32.mrf.mxu0
  %v153 = vadd.f32 0.0, %v152
  %v154 = vpop.f32.mrf.mxu0
  %v155 = vpop.f32.mrf.mxu0
  %v156 = vadd.f32 0.0, %v155
  %v157 = vpop.f32.mrf.mxu0
  %158 = vmatprep.mubr.bf16.mxu0 0
  %159 = vmatmul.mubr.bf16.gmra.mxu0 %v56
  %v160 = vpop.f32.mrf.mxu0
  %v161 = vadd.f32 0.0, %v160
  %v162 = vpop.f32.mrf.mxu0
  %v163 = vpop.f32.mrf.mxu0
  %v164 = vadd.f32 0.0, %v163
  %v165 = vpop.f32.mrf.mxu0
  %166 = vmatprep.mubr.bf16.mxu0 0
  %167 = vmatmul.mubr.bf16.gmra.mxu0 %v57
  %v168 = vpop.f32.mrf.mxu0
  %v169 = vadd.f32 0.0, %v168
  %v170 = vpop.f32.mrf.mxu0
  %v171 = vpop.f32.mrf.mxu0
  %v172 = vadd.f32 0.0, %v171
  %v173 = vpop.f32.mrf.mxu0
  %174 = vdwg.mxu0
  %v175 = vpack.c.bf16 %v148, %v145
  %v176 = vpack.c.bf16 %v156, %v153
  %v177 = vpack.c.bf16 %v164, %v161
  %v178 = vpack.c.bf16 %v172, %v169
  %v183 = vunpack.c.l.b16 %v175
  %v184 = vunpack.c.h.b16 %v175
  %v185 = vunpack.c.l.b16 %v176
  %v186 = vunpack.c.h.b16 %v176
  %v187 = vunpack.c.l.b16 %v177
  %v188 = vunpack.c.h.b16 %v177
  %v189 = vunpack.c.l.b16 %v178
  %v190 = vunpack.c.h.b16 %v178
  %v191 = vpack.c.b16 %v183, %v183
  %v192 = vpack.c.b16 %v184, %v184
  %v193 = vpack.c.b16 %v185, %v185
  %v194 = vpack.c.b16 %v186, %v186
  %v195 = vpack.c.b16 %v187, %v187
  %v196 = vpack.c.b16 %v188, %v188
  %v197 = vpack.c.b16 %v189, %v189
  %v198 = vpack.c.b16 %v190, %v190
  %207 = vst [vmem:[%s2] sm:$0xf] %v191
  %208 = vst [vmem:[%s2 + $0x4] sm:$0xf] %v192
  %209 = vst [vmem:[%s2 + $0x8] sm:$0xf] %v193
  %210 = vst [vmem:[%s2 + $0xc] sm:$0xf] %v194
  %211 = vst [vmem:[%s2 + $0x10] sm:$0xf] %v195
  %212 = vst [vmem:[%s2 + $0x14] sm:$0xf] %v196
  %213 = vst [vmem:[%s2 + $0x18] sm:$0xf] %v197
  %214 = vst [vmem:[%s2 + $0x1c] sm:$0xf] %v198
  %v215 = vadd.f32 %v145, %v148
  %v216 = vadd.f32 %v215, %v153
  %v217 = vadd.f32 %v216, %v156
  %v218 = vadd.f32 %v217, %v161
  %v219 = vadd.f32 %v218, %v164
  %v220 = vadd.f32 %v219, %v169
  %v221 = vadd.f32 %v220, %v172
  %v222 = vrot.slane %v221, 4
  %v223 = vadd.f32 %v221, %v222
  %v224 = vrot.slane %v223, 2
  %v225 = vadd.f32 %v223, %v224
  %v226 = vrot.slane %v225, 1
  %v227 = vadd.f32 %v225, %v226
  %v228 = vmul.f32 %v145, %v145
  %v229 = vmul.f32 %v148, %v148
  %v230 = vmul.f32 %v153, %v153
  %v231 = vmul.f32 %v156, %v156
  %v232 = vmul.f32 %v161, %v161
  %v233 = vmul.f32 %v164, %v164
  %v234 = vmul.f32 %v169, %v169
  %v235 = vmul.f32 %v172, %v172
  %v236 = vadd.f32 %v228, %v229
  %v237 = vadd.f32 %v236, %v230
  %v238 = vadd.f32 %v237, %v231
  %v239 = vadd.f32 %v238, %v232
  %v240 = vadd.f32 %v239, %v233
  %v241 = vadd.f32 %v240, %v234
  %v242 = vadd.f32 %v241, %v235
  %v243 = vrot.slane %v242, 4
  %v244 = vadd.f32 %v242, %v243
  %v245 = vrot.slane %v244, 2
  %v246 = vadd.f32 %v244, %v245
  %v247 = vrot.slane %v246, 1
  %v248 = vadd.f32 %v246, %v247
  %v249 = vlaneseq
  %v250 = vshrl.u32 %v249, 7
  %vm251 = vcmp.eq.s32.totalorder %v250, 0
  %vm252 = vcmp.eq.s32.totalorder %v250, 1
  %v253 = vsel %vm252, %v248, 0.0
  %v254 = vsel %vm251, %v227, %v253
  %255 = vst [vmem:[%s3] sm:$0xff] %v254
  // Predicated region
  $region10: #{_deconv_bn_relu.2} parent=0 // pred_check
    _
  $region11: #{_deconv_bn_relu.2} parent=0 // pred_check_branch
    %257 = sbr.rel (0) target = $region13
  $region12: #{_deconv_bn_relu.2} parent=0 // pred_region
    _
  $region13: #{_deconv_bn_relu.2} parent=0 // pred_fallthru
    _
  // Predicated region
  $region14: #{_deconv_bn_relu.2} parent=0 // pred_check
    _
  $region15: #{_deconv_bn_relu.2} parent=0 // pred_check_branch
    %259 = sbr.rel (0) target = $region17
  $region16: #{_deconv_bn_relu.2} parent=0 // pred_region
    _
  $region17: #{_deconv_bn_relu.2} parent=0 // pred_fallthru
    _
  // Predicated region
  $region18: #{_deconv_bn_relu.2} parent=0 // pred_check
    _
  $region19: #{_deconv_bn_relu.2} parent=0 // pred_check_branch
    %261 = sbr.rel (0) target = $region21
  $region20: #{_deconv_bn_relu.2} parent=0 // pred_region
    _
  $region21: #{_deconv_bn_relu.2} parent=0 // pred_fallthru
    _
  // Predicated region
  $region22: #{_deconv_bn_relu.2} parent=0 // pred_check
    _
  $region23: #{_deconv_bn_relu.2} parent=0 // pred_check_branch
    %263 = sbr.rel (0) target = $region25
  $region24: #{_deconv_bn_relu.2} parent=0 // pred_region
    _
  $region25: #{_deconv_bn_relu.2} parent=0 // pred_fallthru
    _

</llo_original>
